<compile_context>
chip_gen: v7x
topology: tpu7x:2x2x1
jax: 0.10.0
libtpu: 0.0.40
codegen_flags: <defaults>
</compile_context>

<pallas_src>
import functools

import jax
import jax.numpy as jnp
from jax.experimental import pallas as pl
from jax.experimental.pallas import tpu as pltpu

NEG_SLOPE = 0.01      # nn.LeakyReLU default
NUM_LAYERS = 8        # serial matmuls in the fused forward
KROWS = 128           # padded contraction rows per layer block
LANE = 128            # padded output lanes per layer


def _leaky(x):
    return jnp.where(x > 0, x, NEG_SLOPE * x)


def _round_up(n, m):
    return ((n + m - 1) // m) * m


# --------------------------------------------------------------------------
# Kernel
# --------------------------------------------------------------------------
def _make_kernel(input_dim, latent_dim):
    """All layer/row/column placement is baked into the packed slabs; the
    kernel only needs input_dim (layer-0 K) and latent_dim (pred lane)."""

    def kernel(x_ref, w_ref, b_ref, out_ref):
        def linear(h, i, k=KROWS):
            # Full 128-lane weight block + bias row: no lane slicing, padded
            # columns produce exact zeros (zero weights + zero bias).
            w = w_ref[i * KROWS:i * KROWS + k, :]
            b = b_ref[i:i + 1, :]
            return jnp.dot(h, w, preferred_element_type=jnp.float32) + b

        x = x_ref[...]                                   # (tile_m, input_dim)

        # ---- encoder: 3 x (Linear + LeakyReLU) ----
        h = _leaky(linear(x, 0, k=input_dim))            # lanes [0:in/2) real
        h = _leaky(linear(h, 1))                         # lanes [0:in/4) real
        h = _leaky(linear(h, 2))                         # lanes [0:hidden) real

        # ---- fused [V-proj -> attn out_proj -> encoder_out] + LeakyReLU ----
        # Exact for seq_len == 1 self-attention (softmax over 1 key == 1),
        # eval mode / dropout == 0.
        enc = _leaky(linear(h, 3))                       # lanes [0:latent) real

        # ---- merged first layers: shallowdecoder / deepdecoder / regressor ----
        heads = _leaky(linear(enc, 4))   # [s 0:hid | d hid:hid+in/4 | r ...+lat/2 | 0]

        # ---- shallow decoder output -> dec1 at lanes [0:input_dim) ----
        dec1 = linear(heads, 5)

        # ---- merged deep-decoder L2 + regressor L2 ----
        # d2 pre-act at lanes [d2_off:d2_off+in/2), pred pre-act at lane latent_dim.
        dr = linear(heads, 6)
        d = _leaky(dr)                                   # deep-decoder activation

        # ---- deep decoder output -> dec2 at lanes [input_dim:2*input_dim) ----
        dec2 = linear(d, 7)

        # regressor ReLU only on its single lane; everything else masked to 0.
        lane = jax.lax.broadcasted_iota(jnp.int32, dr.shape, 1)
        pred = jnp.where(lane == latent_dim, jnp.maximum(dr, 0.0), 0.0)

        # ---- two unmasked, 128-lane-aligned stores ----
        out_ref[:, 0:LANE] = dec1 + dec2                 # [dec1 | dec2]
        out_ref[:, LANE:2 * LANE] = enc + pred           # [enc | pred | 0...]

    return kernel


# --------------------------------------------------------------------------
# Wrapper
# --------------------------------------------------------------------------
@functools.partial(jax.jit, static_argnames=("input_dim", "latent_dim"))
def attention_ae_end(x, w_slab, b_slab, *, input_dim, latent_dim):
    batch = x.shape[0]

    # Batch grid: tiles only x / out; weight & bias slabs stay resident.
    tile_m = min(max(_round_up(batch, 8), 8), 256)
    padded = _round_up(batch, tile_m)
    if padded != batch:
        x = jnp.pad(x, ((0, padded - batch), (0, 0)))
    grid = (padded // tile_m,)

    kernel = _make_kernel(input_dim, latent_dim)

    out = pl.pallas_call(
        kernel,
        out_shape=jax.ShapeDtypeStruct((padded, 2 * LANE), jnp.float32),
        grid=grid,
        in_specs=[
            pl.BlockSpec((tile_m, input_dim), lambda i: (i, 0)),
            pl.BlockSpec((NUM_LAYERS * KROWS, LANE), lambda i: (0, 0)),  # resident
            pl.BlockSpec((NUM_LAYERS, LANE), lambda i: (0, 0)),          # resident
        ],
        out_specs=pl.BlockSpec((tile_m, 2 * LANE), lambda i: (i, 0)),
        compiler_params=pltpu.CompilerParams(
            dimension_semantics=("parallel",)),
    )(x, w_slab, b_slab)

    dec1 = out[:batch, 0:input_dim]
    dec2 = out[:batch, input_dim:2 * input_dim]
    enc = out[:batch, LANE:LANE + latent_dim]
    pred = out[:batch, LANE + latent_dim:LANE + latent_dim + 1]
    return enc, dec1, dec2, pred


# --------------------------------------------------------------------------
# Parameter construction (PyTorch layouts) and packing into slabs
# --------------------------------------------------------------------------
def init_torch_style_params(key, input_dim, latent_dim, hidden_dim):
    """PyTorch-layout params: Linear weight (out, in), bias (out,).
    MultiheadAttention: in_proj_weight (3E, E), in_proj_bias (3E,),
    out_proj weight (E, E), bias (E,)."""
    E = hidden_dim
    shapes = {
        "enc1_w": (input_dim // 2, input_dim), "enc1_b": (input_dim // 2,),
        "enc2_w": (input_dim // 4, input_dim // 2), "enc2_b": (input_dim // 4,),
        "enc3_w": (hidden_dim, input_dim // 4), "enc3_b": (hidden_dim,),
        "in_proj_w": (3 * E, E), "in_proj_b": (3 * E,),
        "out_proj_w": (E, E), "out_proj_b": (E,),
        "encout_w": (latent_dim, hidden_dim), "encout_b": (latent_dim,),
        "s1_w": (hidden_dim, latent_dim), "s1_b": (hidden_dim,),
        "s2_w": (input_dim, hidden_dim), "s2_b": (input_dim,),
        "d1_w": (input_dim // 4, latent_dim), "d1_b": (input_dim // 4,),
        "d2_w": (input_dim // 2, input_dim // 4), "d2_b": (input_dim // 2,),
        "d3_w": (input_dim, input_dim // 2), "d3_b": (input_dim,),
        "r1_w": (latent_dim // 2, latent_dim), "r1_b": (latent_dim // 2,),
        "r2_w": (1, latent_dim // 2), "r2_b": (1,),
    }
    params = {}
    keys = jax.random.split(key, len(shapes))
    for k, (name, shp) in zip(keys, shapes.items()):
        params[name] = 0.1 * jax.random.normal(k, shp, jnp.float32)
    return params


def pack_params(p, input_dim, latent_dim, hidden_dim, dropout=0.0):
    """Pack all layers into one (8*128, 128) weight slab and one (8, 128)
    bias slab.  INVARIANT (required by the no-slicing kernel): every lane /
    row not explicitly written below stays exactly zero, so padded lanes
    carry exact zeros through LeakyReLU/ReLU."""
    # The attention fold below (V -> out_proj -> encoder_out) is only valid
    # for seq_len == 1 (structural in this module: x.unsqueeze(1)) and eval
    # mode / dropout == 0.
    assert dropout == 0.0, "fused kernel assumes eval mode (dropout == 0)"

    E = hidden_dim
    quarter = input_dim // 4
    half_in = input_dim // 2
    half_lat = latent_dim // 2
    hp = jax.lax.Precision.HIGHEST
    t = jnp.transpose  # (out, in) -> (in, out)

    # Layout constraints of this packing (all satisfied by the demo shapes).
    assert input_dim % 8 == 0
    assert 2 * input_dim <= LANE, "dec1|dec2 must fit one 128-lane slab"
    assert hidden_dim <= KROWS and latent_dim + 1 <= LANE
    assert hidden_dim + quarter + half_lat <= LANE, "merged heads must fit 128 lanes"
    d2_off = _round_up(latent_dim + 1, 8)     # lane offset of d2 output / d3 rows
    assert d2_off + half_in <= LANE

    # V slice of MultiheadAttention in_proj (rows 2E:3E) — Q/K are dead for
    # seq_len == 1.  Fold V-proj -> out_proj -> encoder_out into one linear.
    w_v_t = t(p["in_proj_w"][2 * E:3 * E, :])
    b_v = p["in_proj_b"][2 * E:3 * E]
    w_o_t = t(p["out_proj_w"])
    w_eo_t = t(p["encout_w"])
    w_ae = jnp.dot(jnp.dot(w_v_t, w_o_t, precision=hp), w_eo_t, precision=hp)
    b_ae = jnp.dot(jnp.dot(b_v, w_o_t, precision=hp) + p["out_proj_b"],
                   w_eo_t, precision=hp) + p["encout_b"]

    # Lane offsets of the merged `heads` vector (layer 4 output).
    s_off, d_off, r_off = 0, hidden_dim, hidden_dim + quarter

    # (layer, row_off, col_off, weight (in,out), bias)
    entries = [
        (0, 0, 0, t(p["enc1_w"]), p["enc1_b"]),
        (1, 0, 0, t(p["enc2_w"]), p["enc2_b"]),
        (2, 0, 0, t(p["enc3_w"]), p["enc3_b"]),
        (3, 0, 0, w_ae, b_ae),
        # merged first layers reading `enc`
        (4, 0, s_off, t(p["s1_w"]), p["s1_b"]),
        (4, 0, d_off, t(p["d1_w"]), p["d1_b"]),
        (4, 0, r_off, t(p["r1_w"]), p["r1_b"]),
        # shallow-decoder output: reads heads lanes [0:hidden), writes [0:input_dim)
        (5, s_off, 0, t(p["s2_w"]), p["s2_b"]),
        # merged deep-decoder L2 + regressor L2 (both read `heads`)
        (6, d_off, d2_off, t(p["d2_w"]), p["d2_b"]),
        (6, r_off, latent_dim, t(p["r2_w"]), p["r2_b"]),
        # deep-decoder output: reads d lanes [d2_off:...), writes [input_dim:2*input_dim)
        (7, d2_off, input_dim, t(p["d3_w"]), p["d3_b"]),
    ]

    w_slab = jnp.zeros((NUM_LAYERS * KROWS, LANE), jnp.float32)
    b_slab = jnp.zeros((NUM_LAYERS, LANE), jnp.float32)
    for layer, ro, co, w, b in entries:
        fi, fo = int(w.shape[0]), int(w.shape[1])
        assert ro + fi <= KROWS and co + fo <= LANE
        r0 = layer * KROWS + ro
        w_slab = w_slab.at[r0:r0 + fi, co:co + fo].set(w)
        b_slab = b_slab.at[layer, co:co + fo].set(b)
    return w_slab, b_slab


# --------------------------------------------------------------------------
# Pure-JAX reference (unfused) for a tolerance check
# --------------------------------------------------------------------------
def reference(x, p, input_dim, latent_dim, hidden_dim):
    hp = jax.lax.Precision.HIGHEST

    def lin(h, w, b):
        return jnp.dot(h, w.T, precision=hp) + b

    E = hidden_dim
    h = _leaky(lin(x, p["enc1_w"], p["enc1_b"]))
    h = _leaky(lin(h, p["enc2_w"], p["enc2_b"]))
    h = _leaky(lin(h, p["enc3_w"], p["enc3_b"]))
    # seq_len == 1 attention: softmax over one key == 1 -> out_proj(V(h)).
    v = lin(h, p["in_proj_w"][2 * E:3 * E, :], p["in_proj_b"][2 * E:3 * E])
    attn = lin(v, p["out_proj_w"], p["out_proj_b"])
    enc = _leaky(lin(attn, p["encout_w"], p["encout_b"]))
    s = _leaky(lin(enc, p["s1_w"], p["s1_b"]))
    dec1 = lin(s, p["s2_w"], p["s2_b"])
    d = _leaky(lin(enc, p["d1_w"], p["d1_b"]))
    d = _leaky(lin(d, p["d2_w"], p["d2_b"]))
    dec2 = lin(d, p["d3_w"], p["d3_b"])
    r = _leaky(lin(enc, p["r1_w"], p["r1_b"]))
    pred = jnp.maximum(lin(r, p["r2_w"], p["r2_b"]), 0.0)
    return enc, dec1, dec2, pred


# --------------------------------------------------------------------------
if __name__ == "__main__":
    # Small shapes consistent with the module's forward.
    input_dim, latent_dim, hidden_dim, num_heads = 64, 16, 32, 4
    batch = 8

    key = jax.random.PRNGKey(0)
    k_x, k_p = jax.random.split(key)
    x = jax.random.normal(k_x, (batch, input_dim), dtype=jnp.float32)
    params = init_torch_style_params(k_p, input_dim, latent_dim, hidden_dim)
    w_slab, b_slab = pack_params(params, input_dim, latent_dim, hidden_dim)

    encoded, decoded1, decoded2, pred = attention_ae_end(
        x, w_slab, b_slab, input_dim=input_dim, latent_dim=latent_dim,
    )
    jax.block_until_ready((encoded, decoded1, decoded2, pred))

    assert encoded.shape == (batch, latent_dim)
    assert decoded1.shape == (batch, input_dim)
    assert decoded2.shape == (batch, input_dim)
    assert pred.shape == (batch, 1)

    # Tolerance check against the unfused reference (fusion reorders fp32 ops).
    ref = reference(x, params, input_dim, latent_dim, hidden_dim)
    for got, want in zip((encoded, decoded1, decoded2, pred), ref):
        err = float(jnp.max(jnp.abs(got - want)))
        assert jnp.allclose(got, want, atol=1e-3, rtol=1e-3), err

    print("KERNEL_OK")
</pallas_src>

<mosaic_0001>
module attributes {stable_mosaic.version = 11 : i64} {
  func.func @kernel(%arg0: i32, %arg1: memref<8x64xf32, #tpu.memory_space<vmem>>, %arg2: memref<1024x128xf32, #tpu.memory_space<vmem>>, %arg3: memref<8x128xf32, #tpu.memory_space<vmem>>, %arg4: memref<8x256xf32, #tpu.memory_space<vmem>>) attributes {dimension_semantics = [#tpu.dimension_semantics<parallel>], iteration_bounds = array<i64: 1>, scalar_prefetch = 0 : i64, scratch_operands = 0 : i64, tpu.core_type = #tpu.core_type<tc>, window_params = [{transform_indices = @transform_0, window_bounds = array<i64: 8, 64>}, {pipeline_mode = #tpu.pipeline_mode<synchronous>, transform_indices = @transform_1, window_bounds = array<i64: 1024, 128>}, {pipeline_mode = #tpu.pipeline_mode<synchronous>, transform_indices = @transform_2, window_bounds = array<i64: 8, 128>}, {transform_indices = @transform_3, window_bounds = array<i64: 8, 256>}]} {
    %c0 = arith.constant 0 : index
    %c0_0 = arith.constant 0 : index
    %0 = vector.load %arg1[%c0, %c0_0] : memref<8x64xf32, #tpu.memory_space<vmem>>, vector<8x64xf32>
    %c0_1 = arith.constant 0 : index
    %c0_2 = arith.constant 0 : index
    %1 = vector.load %arg2[%c0_1, %c0_2] : memref<1024x128xf32, #tpu.memory_space<vmem>>, vector<64x128xf32>
    %c0_3 = arith.constant 0 : index
    %c0_4 = arith.constant 0 : index
    %2 = vector.load %arg3[%c0_3, %c0_4] : memref<8x128xf32, #tpu.memory_space<vmem>>, vector<1x128xf32>
    %cst = arith.constant dense<0.000000e+00> : vector<8x128xf32>
    %3 = tpu.matmul %0, %1, %cst {dimension_numbers = #tpu.dot_dimension_numbers<[1], [0], [0], [1], [0, 0, 1, 1], [], []>} : vector<8x64xf32>, vector<64x128xf32>, vector<8x128xf32> -> vector<8x128xf32>
    %4 = vector.broadcast %2 : vector<1x128xf32> to vector<8x128xf32>
    %5 = arith.addf %3, %4 : vector<8x128xf32>
    %cst_5 = arith.constant 0.000000e+00 : f32
    %6 = vector.broadcast %cst_5 : f32 to vector<8x128xf32>
    %7 = arith.cmpf ogt, %5, %6 : vector<8x128xf32>
    %cst_6 = arith.constant 0.00999999977 : f32
    %8 = vector.broadcast %cst_6 : f32 to vector<8x128xf32>
    %9 = arith.mulf %8, %5 : vector<8x128xf32>
    %10 = arith.select %7, %5, %9 : vector<8x128xi1>, vector<8x128xf32>
    %c128 = arith.constant 128 : index
    %c0_7 = arith.constant 0 : index
    %11 = vector.load %arg2[%c128, %c0_7] : memref<1024x128xf32, #tpu.memory_space<vmem>>, vector<128x128xf32>
    %c1 = arith.constant 1 : index
    %c0_8 = arith.constant 0 : index
    %12 = vector.load %arg3[%c1, %c0_8] : memref<8x128xf32, #tpu.memory_space<vmem>>, vector<1x128xf32>
    %cst_9 = arith.constant dense<0.000000e+00> : vector<8x128xf32>
    %13 = tpu.matmul %10, %11, %cst_9 {dimension_numbers = #tpu.dot_dimension_numbers<[1], [0], [0], [1], [0, 0, 1, 1], [], []>} : vector<8x128xf32>, vector<128x128xf32>, vector<8x128xf32> -> vector<8x128xf32>
    %14 = vector.broadcast %12 : vector<1x128xf32> to vector<8x128xf32>
    %15 = arith.addf %13, %14 : vector<8x128xf32>
    %cst_10 = arith.constant 0.000000e+00 : f32
    %16 = vector.broadcast %cst_10 : f32 to vector<8x128xf32>
    %17 = arith.cmpf ogt, %15, %16 : vector<8x128xf32>
    %cst_11 = arith.constant 0.00999999977 : f32
    %18 = vector.broadcast %cst_11 : f32 to vector<8x128xf32>
    %19 = arith.mulf %18, %15 : vector<8x128xf32>
    %20 = arith.select %17, %15, %19 : vector<8x128xi1>, vector<8x128xf32>
    %c256 = arith.constant 256 : index
    %c0_12 = arith.constant 0 : index
    %21 = vector.load %arg2[%c256, %c0_12] : memref<1024x128xf32, #tpu.memory_space<vmem>>, vector<128x128xf32>
    %c2 = arith.constant 2 : index
    %c0_13 = arith.constant 0 : index
    %22 = vector.load %arg3[%c2, %c0_13] : memref<8x128xf32, #tpu.memory_space<vmem>>, vector<1x128xf32>
    %cst_14 = arith.constant dense<0.000000e+00> : vector<8x128xf32>
    %23 = tpu.matmul %20, %21, %cst_14 {dimension_numbers = #tpu.dot_dimension_numbers<[1], [0], [0], [1], [0, 0, 1, 1], [], []>} : vector<8x128xf32>, vector<128x128xf32>, vector<8x128xf32> -> vector<8x128xf32>
    %24 = vector.broadcast %22 : vector<1x128xf32> to vector<8x128xf32>
    %25 = arith.addf %23, %24 : vector<8x128xf32>
    %cst_15 = arith.constant 0.000000e+00 : f32
    %26 = vector.broadcast %cst_15 : f32 to vector<8x128xf32>
    %27 = arith.cmpf ogt, %25, %26 : vector<8x128xf32>
    %cst_16 = arith.constant 0.00999999977 : f32
    %28 = vector.broadcast %cst_16 : f32 to vector<8x128xf32>
    %29 = arith.mulf %28, %25 : vector<8x128xf32>
    %30 = arith.select %27, %25, %29 : vector<8x128xi1>, vector<8x128xf32>
    %c384 = arith.constant 384 : index
    %c0_17 = arith.constant 0 : index
    %31 = vector.load %arg2[%c384, %c0_17] : memref<1024x128xf32, #tpu.memory_space<vmem>>, vector<128x128xf32>
    %c3 = arith.constant 3 : index
    %c0_18 = arith.constant 0 : index
    %32 = vector.load %arg3[%c3, %c0_18] : memref<8x128xf32, #tpu.memory_space<vmem>>, vector<1x128xf32>
    %cst_19 = arith.constant dense<0.000000e+00> : vector<8x128xf32>
    %33 = tpu.matmul %30, %31, %cst_19 {dimension_numbers = #tpu.dot_dimension_numbers<[1], [0], [0], [1], [0, 0, 1, 1], [], []>} : vector<8x128xf32>, vector<128x128xf32>, vector<8x128xf32> -> vector<8x128xf32>
    %34 = vector.broadcast %32 : vector<1x128xf32> to vector<8x128xf32>
    %35 = arith.addf %33, %34 : vector<8x128xf32>
    %cst_20 = arith.constant 0.000000e+00 : f32
    %36 = vector.broadcast %cst_20 : f32 to vector<8x128xf32>
    %37 = arith.cmpf ogt, %35, %36 : vector<8x128xf32>
    %cst_21 = arith.constant 0.00999999977 : f32
    %38 = vector.broadcast %cst_21 : f32 to vector<8x128xf32>
    %39 = arith.mulf %38, %35 : vector<8x128xf32>
    %40 = arith.select %37, %35, %39 : vector<8x128xi1>, vector<8x128xf32>
    %c512 = arith.constant 512 : index
    %c0_22 = arith.constant 0 : index
    %41 = vector.load %arg2[%c512, %c0_22] : memref<1024x128xf32, #tpu.memory_space<vmem>>, vector<128x128xf32>
    %c4 = arith.constant 4 : index
    %c0_23 = arith.constant 0 : index
    %42 = vector.load %arg3[%c4, %c0_23] : memref<8x128xf32, #tpu.memory_space<vmem>>, vector<1x128xf32>
    %cst_24 = arith.constant dense<0.000000e+00> : vector<8x128xf32>
    %43 = tpu.matmul %40, %41, %cst_24 {dimension_numbers = #tpu.dot_dimension_numbers<[1], [0], [0], [1], [0, 0, 1, 1], [], []>} : vector<8x128xf32>, vector<128x128xf32>, vector<8x128xf32> -> vector<8x128xf32>
    %44 = vector.broadcast %42 : vector<1x128xf32> to vector<8x128xf32>
    %45 = arith.addf %43, %44 : vector<8x128xf32>
    %cst_25 = arith.constant 0.000000e+00 : f32
    %46 = vector.broadcast %cst_25 : f32 to vector<8x128xf32>
    %47 = arith.cmpf ogt, %45, %46 : vector<8x128xf32>
    %cst_26 = arith.constant 0.00999999977 : f32
    %48 = vector.broadcast %cst_26 : f32 to vector<8x128xf32>
    %49 = arith.mulf %48, %45 : vector<8x128xf32>
    %50 = arith.select %47, %45, %49 : vector<8x128xi1>, vector<8x128xf32>
    %c640 = arith.constant 640 : index
    %c0_27 = arith.constant 0 : index
    %51 = vector.load %arg2[%c640, %c0_27] : memref<1024x128xf32, #tpu.memory_space<vmem>>, vector<128x128xf32>
    %c5 = arith.constant 5 : index
    %c0_28 = arith.constant 0 : index
    %52 = vector.load %arg3[%c5, %c0_28] : memref<8x128xf32, #tpu.memory_space<vmem>>, vector<1x128xf32>
    %cst_29 = arith.constant dense<0.000000e+00> : vector<8x128xf32>
    %53 = tpu.matmul %50, %51, %cst_29 {dimension_numbers = #tpu.dot_dimension_numbers<[1], [0], [0], [1], [0, 0, 1, 1], [], []>} : vector<8x128xf32>, vector<128x128xf32>, vector<8x128xf32> -> vector<8x128xf32>
    %54 = vector.broadcast %52 : vector<1x128xf32> to vector<8x128xf32>
    %55 = arith.addf %53, %54 : vector<8x128xf32>
    %c768 = arith.constant 768 : index
    %c0_30 = arith.constant 0 : index
    %56 = vector.load %arg2[%c768, %c0_30] : memref<1024x128xf32, #tpu.memory_space<vmem>>, vector<128x128xf32>
    %c6 = arith.constant 6 : index
    %c0_31 = arith.constant 0 : index
    %57 = vector.load %arg3[%c6, %c0_31] : memref<8x128xf32, #tpu.memory_space<vmem>>, vector<1x128xf32>
    %cst_32 = arith.constant dense<0.000000e+00> : vector<8x128xf32>
    %58 = tpu.matmul %50, %56, %cst_32 {dimension_numbers = #tpu.dot_dimension_numbers<[1], [0], [0], [1], [0, 0, 1, 1], [], []>} : vector<8x128xf32>, vector<128x128xf32>, vector<8x128xf32> -> vector<8x128xf32>
    %59 = vector.broadcast %57 : vector<1x128xf32> to vector<8x128xf32>
    %60 = arith.addf %58, %59 : vector<8x128xf32>
    %cst_33 = arith.constant 0.000000e+00 : f32
    %61 = vector.broadcast %cst_33 : f32 to vector<8x128xf32>
    %62 = arith.cmpf ogt, %60, %61 : vector<8x128xf32>
    %cst_34 = arith.constant 0.00999999977 : f32
    %63 = vector.broadcast %cst_34 : f32 to vector<8x128xf32>
    %64 = arith.mulf %63, %60 : vector<8x128xf32>
    %65 = arith.select %62, %60, %64 : vector<8x128xi1>, vector<8x128xf32>
    %c896 = arith.constant 896 : index
    %c0_35 = arith.constant 0 : index
    %66 = vector.load %arg2[%c896, %c0_35] : memref<1024x128xf32, #tpu.memory_space<vmem>>, vector<128x128xf32>
    %c7 = arith.constant 7 : index
    %c0_36 = arith.constant 0 : index
    %67 = vector.load %arg3[%c7, %c0_36] : memref<8x128xf32, #tpu.memory_space<vmem>>, vector<1x128xf32>
    %cst_37 = arith.constant dense<0.000000e+00> : vector<8x128xf32>
    %68 = tpu.matmul %65, %66, %cst_37 {dimension_numbers = #tpu.dot_dimension_numbers<[1], [0], [0], [1], [0, 0, 1, 1], [], []>} : vector<8x128xf32>, vector<128x128xf32>, vector<8x128xf32> -> vector<8x128xf32>
    %69 = vector.broadcast %67 : vector<1x128xf32> to vector<8x128xf32>
    %70 = arith.addf %68, %69 : vector<8x128xf32>
    %71 = tpu.iota {dimensions = array<i32: 1>} : vector<8x128xi32>
    %c16_i32 = arith.constant 16 : i32
    %72 = vector.broadcast %c16_i32 : i32 to vector<8x128xi32>
    %73 = arith.cmpi eq, %71, %72 : vector<8x128xi32>
    %cst_38 = arith.constant 0.000000e+00 : f32
    %74 = vector.broadcast %cst_38 : f32 to vector<8x128xf32>
    %75 = arith.maximumf %60, %74 : vector<8x128xf32>
    %cst_39 = arith.constant 0.000000e+00 : f32
    %76 = vector.broadcast %cst_39 : f32 to vector<8x128xf32>
    %77 = arith.select %73, %75, %76 : vector<8x128xi1>, vector<8x128xf32>
    %78 = arith.addf %55, %70 : vector<8x128xf32>
    %c0_40 = arith.constant 0 : index
    %c0_41 = arith.constant 0 : index
    %79 = vector.load %arg4[%c0_40, %c0_41] : memref<8x256xf32, #tpu.memory_space<vmem>>, vector<8x128xf32>
    tpu.vector_store %arg4[%c0_40, %c0_41], %78 {strides = array<i32>} : memref<8x256xf32, #tpu.memory_space<vmem>>, vector<8x128xf32>,
    %80 = arith.addf %40, %77 : vector<8x128xf32>
    %c0_42 = arith.constant 0 : index
    %c128_43 = arith.constant 128 : index
    %81 = vector.load %arg4[%c0_42, %c128_43] : memref<8x256xf32, #tpu.memory_space<vmem>>, vector<8x128xf32>
    tpu.vector_store %arg4[%c0_42, %c128_43], %80 {strides = array<i32>} : memref<8x256xf32, #tpu.memory_space<vmem>>, vector<8x128xf32>,
    return
  }
  func.func @transform_0(%arg0: i32) -> (i32, i32) {
    %c0_i32 = arith.constant 0 : i32
    %c0_i32_0 = arith.constant 0 : i32
    return %arg0, %c0_i32 : i32, i32
  }
  func.func @transform_1(%arg0: i32) -> (i32, i32) {
    %c0_i32 = arith.constant 0 : i32
    %c0_i32_0 = arith.constant 0 : i32
    %c0_i32_1 = arith.constant 0 : i32
    return %c0_i32, %c0_i32_0 : i32, i32
  }
  func.func @transform_2(%arg0: i32) -> (i32, i32) {
    %c0_i32 = arith.constant 0 : i32
    %c0_i32_0 = arith.constant 0 : i32
    %c0_i32_1 = arith.constant 0 : i32
    return %c0_i32, %c0_i32_0 : i32, i32
  }
  func.func @transform_3(%arg0: i32) -> (i32, i32) {
    %c0_i32 = arith.constant 0 : i32
    %c0_i32_0 = arith.constant 0 : i32
    return %arg0, %c0_i32 : i32, i32
  }
}

</mosaic_0001>

<llo_original>
// kernel: attention_ae_end.1
$region0: #{attention_ae_end.1}
  #allocation0 [shape = 'u32[]', space=smem, size = 0x4, offset = 0x4, fixed_abs, tag = 'smem constant byte address 0x4 - core index']
  #allocation1 [shape = 'u32[144,128]{1,0:T(1,128)}', space=vmem, size = 0x12000, scoped, tag = 'internal scratch']
  %s0 = inlined_call_operand.hbm [shape: f32[8,64], index: 0, kind: input, shape index: {}]
  %s1 = inlined_call_operand.hbm [shape: f32[1024,128], index: 1, kind: input, shape index: {}]
  %s2 = inlined_call_operand.hbm [shape: f32[8,128], index: 2, kind: input, shape index: {}]
  %s3 = inlined_call_operand.vmem [shape: f32[8,256], index: 3, kind: output, shape index: {}]
  %s4 = sld [smem:[#allocation0]]
  $region34: #{attention_ae_end.1} parent=0
    _
  %s6 = ssub.s32 1, %s4
  %s7 = scalar_select 0, %s6, %s4
  $region1: #{attention_ae_end.1} parent=0
    #allocation2 [shape = 'u8[4096]{0}', space=vmem, size = 0x1000, scoped, tag = 'input window, operand 0, single buffered']
    #allocation3 [shape = 's32[1]{0}', space=sflag, size = 0x4, scoped, tag = 'scoped memory for attention_ae_end.1']
    #allocation4 [shape = 'u8[524288]{0}', space=vmem, size = 0x80000, scoped, tag = 'input window, operand 1, single buffered']
    #allocation5 [shape = 's32[1]{0}', space=sflag, size = 0x4, scoped, tag = 'scoped memory for attention_ae_end.1']
    #allocation6 [shape = 'u8[4096]{0}', space=vmem, size = 0x1000, scoped, tag = 'input window, operand 2, single buffered']
    %8 = vsyncpa [#allocation3], 0
    %9 = vsyncpa [#allocation5], 0
    // Predicated region
    $region2: #{attention_ae_end.1} parent=1 // pred_check
      _
    $region3: #{attention_ae_end.1} parent=1 // pred_check_branch
      %11 = sbr.rel (0) target = $region5
    $region4: #{attention_ae_end.1} parent=1 // pred_region
      %s13 = ssub.s32 128, 128
      %14 = vsyncadd [#allocation3], %s13
      %s16 = sshll.u32 [#allocation2], 4
      %s17 = int_to_ptr.vmem [resolvable:$true] %s16
      %19 = dma.hbm_to_vmem [thread:$0]  %s0, 128, %s17, [#allocation3]
    $region5: #{attention_ae_end.1} parent=1 // pred_fallthru
      _
    // Predicated region
    $region6: #{attention_ae_end.1} parent=1 // pred_check
      _
    $region7: #{attention_ae_end.1} parent=1 // pred_check_branch
      %21 = sbr.rel (0) target = $region9
    $region8: #{attention_ae_end.1} parent=1 // pred_region
      %s23 = ssub.s32 16384, 16384
      %24 = vsyncadd [#allocation5], %s23
      %s25 = sshll.u32 [#allocation4], 4
      %s26 = int_to_ptr.vmem [resolvable:$true] %s25
      %31 = dma.hbm_to_vmem [thread:$0]  %s1, 16384, %s26, [#allocation5], 128, 128, 8
    $region9: #{attention_ae_end.1} parent=1 // pred_fallthru
      _
    // Predicated region
    $region10: #{attention_ae_end.1} parent=1 // pred_check
      _
    $region11: #{attention_ae_end.1} parent=1 // pred_check_branch
      %33 = sbr.rel (0) target = $region13
    $region12: #{attention_ae_end.1} parent=1 // pred_region
      %s35 = ssub.s32 128, 128
      %36 = vsyncadd [#allocation5], %s35
      %s38 = sshll.u32 [#allocation6], 4
      %s39 = int_to_ptr.vmem [resolvable:$true] %s38
      %41 = dma.hbm_to_vmem [thread:$0]  %s2, 128, %s39, [#allocation5]
    $region13: #{attention_ae_end.1} parent=1 // pred_fallthru
      _
    // Predicated region
    $region14: #{attention_ae_end.1} parent=1 // pred_check
      _
    $region15: #{attention_ae_end.1} parent=1 // pred_check_branch
      %43 = sbr.rel (0) target = $region17
    $region16: #{attention_ae_end.1} parent=1 // pred_region
      %44 = dma.done [#allocation3], 128
    $region17: #{attention_ae_end.1} parent=1 // pred_fallthru
      _
    // Predicated region
    $region18: #{attention_ae_end.1} parent=1 // pred_check
      _
    $region19: #{attention_ae_end.1} parent=1 // pred_check_branch
      %46 = sbr.rel (0) target = $region21
    $region20: #{attention_ae_end.1} parent=1 // pred_region
      %47 = dma.done [#allocation5], 16384
    $region21: #{attention_ae_end.1} parent=1 // pred_fallthru
      _
    // Predicated region
    $region22: #{attention_ae_end.1} parent=1 // pred_check
      _
    $region23: #{attention_ae_end.1} parent=1 // pred_check_branch
      %49 = sbr.rel (0) target = $region25
    $region24: #{attention_ae_end.1} parent=1 // pred_region
      %50 = dma.done [#allocation5], 128
    $region25: #{attention_ae_end.1} parent=1 // pred_fallthru
      _
    %v51 = vld [vmem:[#allocation2] sm:$0xff]
    %v52 = vld [vmem:[#allocation4] sm:$0xff]
    %v53 = vld [vmem:[#allocation4 + $0x8] sm:$0xff]
    %v54 = vld [vmem:[#allocation4 + $0x10] sm:$0xff]
    %v55 = vld [vmem:[#allocation4 + $0x18] sm:$0xff]
    %v56 = vld [vmem:[#allocation4 + $0x20] sm:$0xff]
    %v57 = vld [vmem:[#allocation4 + $0x28] sm:$0xff]
    %v58 = vld [vmem:[#allocation4 + $0x30] sm:$0xff]
    %v59 = vld [vmem:[#allocation4 + $0x38] sm:$0xff]
    %v60 = vld [vmem:[#allocation6] sm:$0x1]
    %v61 = vlaneseq
    %v62 = vshrl.u32 %v61, 7
    %v63 = vsub.s32 0, %v62
    %v64 = vrot.slane %v60, %v63
    %vm65 = vcmask 523264
    %v67 = vsel %vm65, %v51, 0
    %69 = vmatprep.subr.mxu0 0.0
    %70 = vmatpush1.msra.mxu0 %v52
    %71 = vmatprep.subr.mxu0 0.0
    %72 = vmatpush1.msra.mxu0 %v53
    %73 = vmatprep.subr.mxu0 0.0
    %74 = vmatpush1.msra.mxu0 %v54
    %75 = vmatprep.subr.mxu0 0.0
    %76 = vmatpush1.msra.mxu0 %v55
    %77 = vmatprep.subr.mxu0 0.0
    %78 = vmatpush1.msra.mxu0 %v56
    %79 = vmatprep.subr.mxu0 0.0
    %80 = vmatpush1.msra.mxu0 %v57
    %81 = vmatprep.subr.mxu0 0.0
    %82 = vmatpush1.msra.mxu0 %v58
    %83 = vmatprep.subr.mxu0 0.0
    %84 = vmatpush1.msra.mxu0 %v59
    %85 = vmatprep.subr.mxu0 0.0
    %86 = vmatpush1.msra.mxu0 0.0
    %87 = vmatprep.subr.mxu0 0.0
    %88 = vmatpush1.msra.mxu0 0.0
    %89 = vmatprep.subr.mxu0 0.0
    %90 = vmatpush1.msra.mxu0 0.0
    %91 = vmatprep.subr.mxu0 0.0
    %92 = vmatpush1.msra.mxu0 0.0
    %93 = vmatprep.subr.mxu0 0.0
    %94 = vmatpush1.msra.mxu0 0.0
    %95 = vmatprep.subr.mxu0 0.0
    %96 = vmatpush1.msra.mxu0 0.0
    %97 = vmatprep.subr.mxu0 0.0
    %98 = vmatpush1.msra.mxu0 0.0
    %99 = vmatprep.subr.mxu0 0.0
    %100 = vmatpush1.msra.mxu0 0.0
    %101 = vmatprep.subr.mxu0 0.0
    %102 = vmatpush1.msra.mxu0 0.0
    %103 = vmatprep.subr.mxu0 0.0
    %104 = vmatpush1.msra.mxu0 0.0
    %105 = vmatprep.subr.mxu0 0.0
    %106 = vmatpush1.msra.mxu0 0.0
    %107 = vmatprep.subr.mxu0 0.0
    %108 = vmatpush1.msra.mxu0 0.0
    %109 = vmatprep.subr.mxu0 0.0
    %110 = vmatpush1.msra.mxu0 0.0
    %111 = vmatprep.subr.mxu0 0.0
    %112 = vmatpush1.msra.mxu0 0.0
    %113 = vmatprep.subr.mxu0 0.0
    %114 = vmatpush1.msra.mxu0 0.0
    %115 = vmatprep.subr.mxu0 0.0
    %116 = vmatpush1.msra.mxu0 0.0
    %117 = vmatprep.subr.mxu0 0.0
    %118 = vmatpush1.msra.mxu0 0.0
    %119 = vmatprep.subr.mxu0 0.0
    %120 = vmatpush1.msra.mxu0 0.0
    %121 = vmatprep.subr.mxu0 0.0
    %122 = vmatpush1.msra.mxu0 0.0
    %123 = vmatprep.subr.mxu0 0.0
    %124 = vmatpush1.msra.mxu0 0.0
    %125 = vmatprep.subr.mxu0 0.0
    %126 = vmatpush1.msra.mxu0 0.0
    %127 = vmatprep.subr.mxu0 0.0
    %128 = vmatpush1.msra.mxu0 0.0
    %129 = vmatprep.subr.mxu0 0.0
    %130 = vmatpush1.msra.mxu0 0.0
    %131 = vmatprep.subr.mxu0 0.0
    %132 = vmatpush1.msra.mxu0 0.0
    %133 = vmatprep.mubr.f32.mxu0 0.0
    %134 = vmatmul.mubr.f32.gmra.mrb[0].mxu0 %v67
    %v135 = vpop.f32.mrb[0].mxu0
    %v136 = vadd.f32 %v64, %v135
    %v137 = vpop.f32.mrb[0].mxu0
    %138 = vdwg.mxu0
    %vm139 = vcmp.gt.f32.partialorder %v136, 0.0
    %v140 = vmul.f32 %v136, 0.01
    %v141 = vsel %vm139, %v136, %v140
    %v142 = vld [vmem:[#allocation4 + $0x80] sm:$0xff]
    %v143 = vld [vmem:[#allocation4 + $0x88] sm:$0xff]
    %v144 = vld [vmem:[#allocation4 + $0x90] sm:$0xff]
    %v145 = vld [vmem:[#allocation4 + $0x98] sm:$0xff]
    %v146 = vld [vmem:[#allocation4 + $0xa0] sm:$0xff]
    %v147 = vld [vmem:[#allocation4 + $0xa8] sm:$0xff]
    %v148 = vld [vmem:[#allocation4 + $0xb0] sm:$0xff]
    %v149 = vld [vmem:[#allocation4 + $0xb8] sm:$0xff]
    %v150 = vld [vmem:[#allocation4 + $0xc0] sm:$0xff]
    %v151 = vld [vmem:[#allocation4 + $0xc8] sm:$0xff]
    %v152 = vld [vmem:[#allocation4 + $0xd0] sm:$0xff]
    %v153 = vld [vmem:[#allocation4 + $0xd8] sm:$0xff]
    %v154 = vld [vmem:[#allocation4 + $0xe0] sm:$0xff]
    %v155 = vld [vmem:[#allocation4 + $0xe8] sm:$0xff]
    %v156 = vld [vmem:[#allocation4 + $0xf0] sm:$0xff]
    %v157 = vld [vmem:[#allocation4 + $0xf8] sm:$0xff]
    %v158 = vld [vmem:[#allocation6 + $0x1] sm:$0x1]
    %v159 = vlaneseq
    %v160 = vshrl.u32 %v159, 7
    %v161 = vsub.s32 0, %v160
    %v162 = vrot.slane %v158, %v161
    %163 = vmatprep.subr.mxu0 0.0
    %164 = vmatpush1.msra.mxu0 %v142
    %165 = vmatprep.subr.mxu0 0.0
    %166 = vmatpush1.msra.mxu0 %v143
    %167 = vmatprep.subr.mxu0 0.0
    %168 = vmatpush1.msra.mxu0 %v144
    %169 = vmatprep.subr.mxu0 0.0
    %170 = vmatpush1.msra.mxu0 %v145
    %171 = vmatprep.subr.mxu0 0.0
    %172 = vmatpush1.msra.mxu0 %v146
    %173 = vmatprep.subr.mxu0 0.0
    %174 = vmatpush1.msra.mxu0 %v147
    %175 = vmatprep.subr.mxu0 0.0
    %176 = vmatpush1.msra.mxu0 %v148
    %177 = vmatprep.subr.mxu0 0.0
    %178 = vmatpush1.msra.mxu0 %v149
    %179 = vmatprep.subr.mxu0 0.0
    %180 = vmatpush1.msra.mxu0 %v150
    %181 = vmatprep.subr.mxu0 0.0
    %182 = vmatpush1.msra.mxu0 %v151
    %183 = vmatprep.subr.mxu0 0.0
    %184 = vmatpush1.msra.mxu0 %v152
    %185 = vmatprep.subr.mxu0 0.0
    %186 = vmatpush1.msra.mxu0 %v153
    %187 = vmatprep.subr.mxu0 0.0
    %188 = vmatpush1.msra.mxu0 %v154
    %189 = vmatprep.subr.mxu0 0.0
    %190 = vmatpush1.msra.mxu0 %v155
    %191 = vmatprep.subr.mxu0 0.0
    %192 = vmatpush1.msra.mxu0 %v156
    %193 = vmatprep.subr.mxu0 0.0
    %194 = vmatpush1.msra.mxu0 %v157
    %195 = vmatprep.subr.mxu0 0.0
    %196 = vmatpush1.msra.mxu0 0.0
    %197 = vmatprep.subr.mxu0 0.0
    %198 = vmatpush1.msra.mxu0 0.0
    %199 = vmatprep.subr.mxu0 0.0
    %200 = vmatpush1.msra.mxu0 0.0
    %201 = vmatprep.subr.mxu0 0.0
    %202 = vmatpush1.msra.mxu0 0.0
    %203 = vmatprep.subr.mxu0 0.0
    %204 = vmatpush1.msra.mxu0 0.0
    %205 = vmatprep.subr.mxu0 0.0
    %206 = vmatpush1.msra.mxu0 0.0
    %207 = vmatprep.subr.mxu0 0.0
    %208 = vmatpush1.msra.mxu0 0.0
    %209 = vmatprep.subr.mxu0 0.0
    %210 = vmatpush1.msra.mxu0 0.0
    %211 = vmatprep.subr.mxu0 0.0
    %212 = vmatpush1.msra.mxu0 0.0
    %213 = vmatprep.subr.mxu0 0.0
    %214 = vmatpush1.msra.mxu0 0.0
    %215 = vmatprep.subr.mxu0 0.0
    %216 = vmatpush1.msra.mxu0 0.0
    %217 = vmatprep.subr.mxu0 0.0
    %218 = vmatpush1.msra.mxu0 0.0
    %219 = vmatprep.subr.mxu0 0.0
    %220 = vmatpush1.msra.mxu0 0.0
    %221 = vmatprep.subr.mxu0 0.0
    %222 = vmatpush1.msra.mxu0 0.0
    %223 = vmatprep.subr.mxu0 0.0
    %224 = vmatpush1.msra.mxu0 0.0
    %225 = vmatprep.subr.mxu0 0.0
    %226 = vmatpush1.msra.mxu0 0.0
    %227 = vmatprep.mubr.f32.mxu0 0.0
    %228 = vmatmul.mubr.f32.gmra.mrb[0].mxu0 %v141
    %v229 = vpop.f32.mrb[0].mxu0
    %v230 = vadd.f32 %v162, %v229
    %v231 = vpop.f32.mrb[0].mxu0
    %232 = vdwg.mxu0
    %vm233 = vcmp.gt.f32.partialorder %v230, 0.0
    %v234 = vmul.f32 %v230, 0.01
    %v235 = vsel %vm233, %v230, %v234
    %v236 = vld [vmem:[#allocation4 + $0x100] sm:$0xff]
    %v237 = vld [vmem:[#allocation4 + $0x108] sm:$0xff]
    %v238 = vld [vmem:[#allocation4 + $0x110] sm:$0xff]
    %v239 = vld [vmem:[#allocation4 + $0x118] sm:$0xff]
    %v240 = vld [vmem:[#allocation4 + $0x120] sm:$0xff]
    %v241 = vld [vmem:[#allocation4 + $0x128] sm:$0xff]
    %v242 = vld [vmem:[#allocation4 + $0x130] sm:$0xff]
    %v243 = vld [vmem:[#allocation4 + $0x138] sm:$0xff]
    %v244 = vld [vmem:[#allocation4 + $0x140] sm:$0xff]
    %v245 = vld [vmem:[#allocation4 + $0x148] sm:$0xff]
    %v246 = vld [vmem:[#allocation4 + $0x150] sm:$0xff]
    %v247 = vld [vmem:[#allocation4 + $0x158] sm:$0xff]
    %v248 = vld [vmem:[#allocation4 + $0x160] sm:$0xff]
    %v249 = vld [vmem:[#allocation4 + $0x168] sm:$0xff]
    %v250 = vld [vmem:[#allocation4 + $0x170] sm:$0xff]
    %v251 = vld [vmem:[#allocation4 + $0x178] sm:$0xff]
    %v252 = vld [vmem:[#allocation6 + $0x2] sm:$0x1]
    %v253 = vlaneseq
    %v254 = vshrl.u32 %v253, 7
    %v255 = vsub.s32 0, %v254
    %v256 = vrot.slane %v252, %v255
    %257 = vmatprep.subr.mxu0 0.0
    %258 = vmatpush1.msra.mxu0 %v236
    %259 = vmatprep.subr.mxu0 0.0
    %260 = vmatpush1.msra.mxu0 %v237
    %261 = vmatprep.subr.mxu0 0.0
    %262 = vmatpush1.msra.mxu0 %v238
    %263 = vmatprep.subr.mxu0 0.0
    %264 = vmatpush1.msra.mxu0 %v239
    %265 = vmatprep.subr.mxu0 0.0
    %266 = vmatpush1.msra.mxu0 %v240
    %267 = vmatprep.subr.mxu0 0.0
    %268 = vmatpush1.msra.mxu0 %v241
    %269 = vmatprep.subr.mxu0 0.0
    %270 = vmatpush1.msra.mxu0 %v242
    %271 = vmatprep.subr.mxu0 0.0
    %272 = vmatpush1.msra.mxu0 %v243
    %273 = vmatprep.subr.mxu0 0.0
    %274 = vmatpush1.msra.mxu0 %v244
    %275 = vmatprep.subr.mxu0 0.0
    %276 = vmatpush1.msra.mxu0 %v245
    %277 = vmatprep.subr.mxu0 0.0
    %278 = vmatpush1.msra.mxu0 %v246
    %279 = vmatprep.subr.mxu0 0.0
    %280 = vmatpush1.msra.mxu0 %v247
    %281 = vmatprep.subr.mxu0 0.0
    %282 = vmatpush1.msra.mxu0 %v248
    %283 = vmatprep.subr.mxu0 0.0
    %284 = vmatpush1.msra.mxu0 %v249
    %285 = vmatprep.subr.mxu0 0.0
    %286 = vmatpush1.msra.mxu0 %v250
    %287 = vmatprep.subr.mxu0 0.0
    %288 = vmatpush1.msra.mxu0 %v251
    %289 = vmatprep.subr.mxu0 0.0
    %290 = vmatpush1.msra.mxu0 0.0
    %291 = vmatprep.subr.mxu0 0.0
    %292 = vmatpush1.msra.mxu0 0.0
    %293 = vmatprep.subr.mxu0 0.0
    %294 = vmatpush1.msra.mxu0 0.0
    %295 = vmatprep.subr.mxu0 0.0
    %296 = vmatpush1.msra.mxu0 0.0
    %297 = vmatprep.subr.mxu0 0.0
    %298 = vmatpush1.msra.mxu0 0.0
    %299 = vmatprep.subr.mxu0 0.0
    %300 = vmatpush1.msra.mxu0 0.0
    %301 = vmatprep.subr.mxu0 0.0
    %302 = vmatpush1.msra.mxu0 0.0
    %303 = vmatprep.subr.mxu0 0.0
    %304 = vmatpush1.msra.mxu0 0.0
    %305 = vmatprep.subr.mxu0 0.0
    %306 = vmatpush1.msra.mxu0 0.0
    %307 = vmatprep.subr.mxu0 0.0
    %308 = vmatpush1.msra.mxu0 0.0
    %309 = vmatprep.subr.mxu0 0.0
    %310 = vmatpush1.msra.mxu0 0.0
    %311 = vmatprep.subr.mxu0 0.0
    %312 = vmatpush1.msra.mxu0 0.0
    %313 = vmatprep.subr.mxu0 0.0
    %314 = vmatpush1.msra.mxu0 0.0
    %315 = vmatprep.subr.mxu0 0.0
    %316 = vmatpush1.msra.mxu0 0.0
    %317 = vmatprep.subr.mxu0 0.0
    %318 = vmatpush1.msra.mxu0 0.0
    %319 = vmatprep.subr.mxu0 0.0
    %320 = vmatpush1.msra.mxu0 0.0
    %321 = vmatprep.mubr.f32.mxu0 0.0
    %322 = vmatmul.mubr.f32.gmra.mrb[0].mxu0 %v235
    %v323 = vpop.f32.mrb[0].mxu0
    %v324 = vadd.f32 %v256, %v323
    %v325 = vpop.f32.mrb[0].mxu0
    %326 = vdwg.mxu0
    %vm327 = vcmp.gt.f32.partialorder %v324, 0.0
    %v328 = vmul.f32 %v324, 0.01
    %v329 = vsel %vm327, %v324, %v328
    %v330 = vld [vmem:[#allocation4 + $0x180] sm:$0xff]
    %v331 = vld [vmem:[#allocation4 + $0x188] sm:$0xff]
    %v332 = vld [vmem:[#allocation4 + $0x190] sm:$0xff]
    %v333 = vld [vmem:[#allocation4 + $0x198] sm:$0xff]
    %v334 = vld [vmem:[#allocation4 + $0x1a0] sm:$0xff]
    %v335 = vld [vmem:[#allocation4 + $0x1a8] sm:$0xff]
    %v336 = vld [vmem:[#allocation4 + $0x1b0] sm:$0xff]
    %v337 = vld [vmem:[#allocation4 + $0x1b8] sm:$0xff]
    %v338 = vld [vmem:[#allocation4 + $0x1c0] sm:$0xff]
    %v339 = vld [vmem:[#allocation4 + $0x1c8] sm:$0xff]
    %v340 = vld [vmem:[#allocation4 + $0x1d0] sm:$0xff]
    %v341 = vld [vmem:[#allocation4 + $0x1d8] sm:$0xff]
    %v342 = vld [vmem:[#allocation4 + $0x1e0] sm:$0xff]
    %v343 = vld [vmem:[#allocation4 + $0x1e8] sm:$0xff]
    %v344 = vld [vmem:[#allocation4 + $0x1f0] sm:$0xff]
    %v345 = vld [vmem:[#allocation4 + $0x1f8] sm:$0xff]
    %v346 = vld [vmem:[#allocation6 + $0x3] sm:$0x1]
    %v347 = vlaneseq
    %v348 = vshrl.u32 %v347, 7
    %v349 = vsub.s32 0, %v348
    %v350 = vrot.slane %v346, %v349
    %351 = vmatprep.subr.mxu0 0.0
    %352 = vmatpush1.msra.mxu0 %v330
    %353 = vmatprep.subr.mxu0 0.0
    %354 = vmatpush1.msra.mxu0 %v331
    %355 = vmatprep.subr.mxu0 0.0
    %356 = vmatpush1.msra.mxu0 %v332
    %357 = vmatprep.subr.mxu0 0.0
    %358 = vmatpush1.msra.mxu0 %v333
    %359 = vmatprep.subr.mxu0 0.0
    %360 = vmatpush1.msra.mxu0 %v334
    %361 = vmatprep.subr.mxu0 0.0
    %362 = vmatpush1.msra.mxu0 %v335
    %363 = vmatprep.subr.mxu0 0.0
    %364 = vmatpush1.msra.mxu0 %v336
    %365 = vmatprep.subr.mxu0 0.0
    %366 = vmatpush1.msra.mxu0 %v337
    %367 = vmatprep.subr.mxu0 0.0
    %368 = vmatpush1.msra.mxu0 %v338
    %369 = vmatprep.subr.mxu0 0.0
    %370 = vmatpush1.msra.mxu0 %v339
    %371 = vmatprep.subr.mxu0 0.0
    %372 = vmatpush1.msra.mxu0 %v340
    %373 = vmatprep.subr.mxu0 0.0
    %374 = vmatpush1.msra.mxu0 %v341
    %375 = vmatprep.subr.mxu0 0.0
    %376 = vmatpush1.msra.mxu0 %v342
    %377 = vmatprep.subr.mxu0 0.0
    %378 = vmatpush1.msra.mxu0 %v343
    %379 = vmatprep.subr.mxu0 0.0
    %380 = vmatpush1.msra.mxu0 %v344
    %381 = vmatprep.subr.mxu0 0.0
    %382 = vmatpush1.msra.mxu0 %v345
    %383 = vmatprep.subr.mxu0 0.0
    %384 = vmatpush1.msra.mxu0 0.0
    %385 = vmatprep.subr.mxu0 0.0
    %386 = vmatpush1.msra.mxu0 0.0
    %387 = vmatprep.subr.mxu0 0.0
    %388 = vmatpush1.msra.mxu0 0.0
    %389 = vmatprep.subr.mxu0 0.0
    %390 = vmatpush1.msra.mxu0 0.0
    %391 = vmatprep.subr.mxu0 0.0
    %392 = vmatpush1.msra.mxu0 0.0
    %393 = vmatprep.subr.mxu0 0.0
    %394 = vmatpush1.msra.mxu0 0.0
    %395 = vmatprep.subr.mxu0 0.0
    %396 = vmatpush1.msra.mxu0 0.0
    %397 = vmatprep.subr.mxu0 0.0
    %398 = vmatpush1.msra.mxu0 0.0
    %399 = vmatprep.subr.mxu0 0.0
    %400 = vmatpush1.msra.mxu0 0.0
    %401 = vmatprep.subr.mxu0 0.0
    %402 = vmatpush1.msra.mxu0 0.0
    %403 = vmatprep.subr.mxu0 0.0
    %404 = vmatpush1.msra.mxu0 0.0
    %405 = vmatprep.subr.mxu0 0.0
    %406 = vmatpush1.msra.mxu0 0.0
    %407 = vmatprep.subr.mxu0 0.0
    %408 = vmatpush1.msra.mxu0 0.0
    %409 = vmatprep.subr.mxu0 0.0
    %410 = vmatpush1.msra.mxu0 0.0
    %411 = vmatprep.subr.mxu0 0.0
    %412 = vmatpush1.msra.mxu0 0.0
    %413 = vmatprep.subr.mxu0 0.0
    %414 = vmatpush1.msra.mxu0 0.0
    %415 = vmatprep.mubr.f32.mxu0 0.0
    %416 = vmatmul.mubr.f32.gmra.mrb[0].mxu0 %v329
    %v417 = vpop.f32.mrb[0].mxu0
    %v418 = vadd.f32 %v350, %v417
    %v419 = vpop.f32.mrb[0].mxu0
    %420 = vdwg.mxu0
    %vm421 = vcmp.gt.f32.partialorder %v418, 0.0
    %v422 = vmul.f32 %v418, 0.01
    %v423 = vsel %vm421, %v418, %v422
    %v424 = vld [vmem:[#allocation4 + $0x200] sm:$0xff]
    %v425 = vld [vmem:[#allocation4 + $0x208] sm:$0xff]
    %v426 = vld [vmem:[#allocation4 + $0x210] sm:$0xff]
    %v427 = vld [vmem:[#allocation4 + $0x218] sm:$0xff]
    %v428 = vld [vmem:[#allocation4 + $0x220] sm:$0xff]
    %v429 = vld [vmem:[#allocation4 + $0x228] sm:$0xff]
    %v430 = vld [vmem:[#allocation4 + $0x230] sm:$0xff]
    %v431 = vld [vmem:[#allocation4 + $0x238] sm:$0xff]
    %v432 = vld [vmem:[#allocation4 + $0x240] sm:$0xff]
    %v433 = vld [vmem:[#allocation4 + $0x248] sm:$0xff]
    %v434 = vld [vmem:[#allocation4 + $0x250] sm:$0xff]
    %v435 = vld [vmem:[#allocation4 + $0x258] sm:$0xff]
    %v436 = vld [vmem:[#allocation4 + $0x260] sm:$0xff]
    %v437 = vld [vmem:[#allocation4 + $0x268] sm:$0xff]
    %v438 = vld [vmem:[#allocation4 + $0x270] sm:$0xff]
    %v439 = vld [vmem:[#allocation4 + $0x278] sm:$0xff]
    %v440 = vld [vmem:[#allocation6 + $0x4] sm:$0x1]
    %v441 = vlaneseq
    %v442 = vshrl.u32 %v441, 7
    %v443 = vsub.s32 0, %v442
    %v444 = vrot.slane %v440, %v443
    %445 = vmatprep.subr.mxu0 0.0
    %446 = vmatpush1.msra.mxu0 %v424
    %447 = vmatprep.subr.mxu0 0.0
    %448 = vmatpush1.msra.mxu0 %v425
    %449 = vmatprep.subr.mxu0 0.0
    %450 = vmatpush1.msra.mxu0 %v426
    %451 = vmatprep.subr.mxu0 0.0
    %452 = vmatpush1.msra.mxu0 %v427
    %453 = vmatprep.subr.mxu0 0.0
    %454 = vmatpush1.msra.mxu0 %v428
    %455 = vmatprep.subr.mxu0 0.0
    %456 = vmatpush1.msra.mxu0 %v429
    %457 = vmatprep.subr.mxu0 0.0
    %458 = vmatpush1.msra.mxu0 %v430
    %459 = vmatprep.subr.mxu0 0.0
    %460 = vmatpush1.msra.mxu0 %v431
    %461 = vmatprep.subr.mxu0 0.0
    %462 = vmatpush1.msra.mxu0 %v432
    %463 = vmatprep.subr.mxu0 0.0
    %464 = vmatpush1.msra.mxu0 %v433
    %465 = vmatprep.subr.mxu0 0.0
    %466 = vmatpush1.msra.mxu0 %v434
    %467 = vmatprep.subr.mxu0 0.0
    %468 = vmatpush1.msra.mxu0 %v435
    %469 = vmatprep.subr.mxu0 0.0
    %470 = vmatpush1.msra.mxu0 %v436
    %471 = vmatprep.subr.mxu0 0.0
    %472 = vmatpush1.msra.mxu0 %v437
    %473 = vmatprep.subr.mxu0 0.0
    %474 = vmatpush1.msra.mxu0 %v438
    %475 = vmatprep.subr.mxu0 0.0
    %476 = vmatpush1.msra.mxu0 %v439
    %477 = vmatprep.subr.mxu0 0.0
    %478 = vmatpush1.msra.mxu0 0.0
    %479 = vmatprep.subr.mxu0 0.0
    %480 = vmatpush1.msra.mxu0 0.0
    %481 = vmatprep.subr.mxu0 0.0
    %482 = vmatpush1.msra.mxu0 0.0
    %483 = vmatprep.subr.mxu0 0.0
    %484 = vmatpush1.msra.mxu0 0.0
    %485 = vmatprep.subr.mxu0 0.0
    %486 = vmatpush1.msra.mxu0 0.0
    %487 = vmatprep.subr.mxu0 0.0
    %488 = vmatpush1.msra.mxu0 0.0
    %489 = vmatprep.subr.mxu0 0.0
    %490 = vmatpush1.msra.mxu0 0.0
    %491 = vmatprep.subr.mxu0 0.0
    %492 = vmatpush1.msra.mxu0 0.0
    %493 = vmatprep.subr.mxu0 0.0
    %494 = vmatpush1.msra.mxu0 0.0
    %495 = vmatprep.subr.mxu0 0.0
    %496 = vmatpush1.msra.mxu0 0.0
    %497 = vmatprep.subr.mxu0 0.0
    %498 = vmatpush1.msra.mxu0 0.0
    %499 = vmatprep.subr.mxu0 0.0
    %500 = vmatpush1.msra.mxu0 0.0
    %501 = vmatprep.subr.mxu0 0.0
    %502 = vmatpush1.msra.mxu0 0.0
    %503 = vmatprep.subr.mxu0 0.0
    %504 = vmatpush1.msra.mxu0 0.0
    %505 = vmatprep.subr.mxu0 0.0
    %506 = vmatpush1.msra.mxu0 0.0
    %507 = vmatprep.subr.mxu0 0.0
    %508 = vmatpush1.msra.mxu0 0.0
    %509 = vmatprep.mubr.f32.mxu0 0.0
    %510 = vmatmul.mubr.f32.gmra.mrb[0].mxu0 %v423
    %v511 = vpop.f32.mrb[0].mxu0
    %v512 = vadd.f32 %v444, %v511
    %v513 = vpop.f32.mrb[0].mxu0
    %514 = vdwg.mxu0
    %vm515 = vcmp.gt.f32.partialorder %v512, 0.0
    %v516 = vmul.f32 %v512, 0.01
    %v517 = vsel %vm515, %v512, %v516
    %v518 = vld [vmem:[#allocation4 + $0x280] sm:$0xff]
    %v519 = vld [vmem:[#allocation4 + $0x288] sm:$0xff]
    %v520 = vld [vmem:[#allocation4 + $0x290] sm:$0xff]
    %v521 = vld [vmem:[#allocation4 + $0x298] sm:$0xff]
    %v522 = vld [vmem:[#allocation4 + $0x2a0] sm:$0xff]
    %v523 = vld [vmem:[#allocation4 + $0x2a8] sm:$0xff]
    %v524 = vld [vmem:[#allocation4 + $0x2b0] sm:$0xff]
    %v525 = vld [vmem:[#allocation4 + $0x2b8] sm:$0xff]
    %v526 = vld [vmem:[#allocation4 + $0x2c0] sm:$0xff]
    %v527 = vld [vmem:[#allocation4 + $0x2c8] sm:$0xff]
    %v528 = vld [vmem:[#allocation4 + $0x2d0] sm:$0xff]
    %v529 = vld [vmem:[#allocation4 + $0x2d8] sm:$0xff]
    %v530 = vld [vmem:[#allocation4 + $0x2e0] sm:$0xff]
    %v531 = vld [vmem:[#allocation4 + $0x2e8] sm:$0xff]
    %v532 = vld [vmem:[#allocation4 + $0x2f0] sm:$0xff]
    %v533 = vld [vmem:[#allocation4 + $0x2f8] sm:$0xff]
    %v534 = vld [vmem:[#allocation6 + $0x5] sm:$0x1]
    %v535 = vlaneseq
    %v536 = vshrl.u32 %v535, 7
    %v537 = vsub.s32 0, %v536
    %v538 = vrot.slane %v534, %v537
    %539 = vmatprep.subr.mxu0 0.0
    %540 = vmatpush1.msra.mxu0 %v518
    %541 = vmatprep.subr.mxu0 0.0
    %542 = vmatpush1.msra.mxu0 %v519
    %543 = vmatprep.subr.mxu0 0.0
    %544 = vmatpush1.msra.mxu0 %v520
    %545 = vmatprep.subr.mxu0 0.0
    %546 = vmatpush1.msra.mxu0 %v521
    %547 = vmatprep.subr.mxu0 0.0
    %548 = vmatpush1.msra.mxu0 %v522
    %549 = vmatprep.subr.mxu0 0.0
    %550 = vmatpush1.msra.mxu0 %v523
    %551 = vmatprep.subr.mxu0 0.0
    %552 = vmatpush1.msra.mxu0 %v524
    %553 = vmatprep.subr.mxu0 0.0
    %554 = vmatpush1.msra.mxu0 %v525
    %555 = vmatprep.subr.mxu0 0.0
    %556 = vmatpush1.msra.mxu0 %v526
    %557 = vmatprep.subr.mxu0 0.0
    %558 = vmatpush1.msra.mxu0 %v527
    %559 = vmatprep.subr.mxu0 0.0
    %560 = vmatpush1.msra.mxu0 %v528
    %561 = vmatprep.subr.mxu0 0.0
    %562 = vmatpush1.msra.mxu0 %v529
    %563 = vmatprep.subr.mxu0 0.0
    %564 = vmatpush1.msra.mxu0 %v530
    %565 = vmatprep.subr.mxu0 0.0
    %566 = vmatpush1.msra.mxu0 %v531
    %567 = vmatprep.subr.mxu0 0.0
    %568 = vmatpush1.msra.mxu0 %v532
    %569 = vmatprep.subr.mxu0 0.0
    %570 = vmatpush1.msra.mxu0 %v533
    %571 = vmatprep.subr.mxu0 0.0
    %572 = vmatpush1.msra.mxu0 0.0
    %573 = vmatprep.subr.mxu0 0.0
    %574 = vmatpush1.msra.mxu0 0.0
    %575 = vmatprep.subr.mxu0 0.0
    %576 = vmatpush1.msra.mxu0 0.0
    %577 = vmatprep.subr.mxu0 0.0
    %578 = vmatpush1.msra.mxu0 0.0
    %579 = vmatprep.subr.mxu0 0.0
    %580 = vmatpush1.msra.mxu0 0.0
    %581 = vmatprep.subr.mxu0 0.0
    %582 = vmatpush1.msra.mxu0 0.0
    %583 = vmatprep.subr.mxu0 0.0
    %584 = vmatpush1.msra.mxu0 0.0
    %585 = vmatprep.subr.mxu0 0.0
    %586 = vmatpush1.msra.mxu0 0.0
    %587 = vmatprep.subr.mxu0 0.0
    %588 = vmatpush1.msra.mxu0 0.0
    %589 = vmatprep.subr.mxu0 0.0
    %590 = vmatpush1.msra.mxu0 0.0
    %591 = vmatprep.subr.mxu0 0.0
    %592 = vmatpush1.msra.mxu0 0.0
    %593 = vmatprep.subr.mxu0 0.0
    %594 = vmatpush1.msra.mxu0 0.0
    %595 = vmatprep.subr.mxu0 0.0
    %596 = vmatpush1.msra.mxu0 0.0
    %597 = vmatprep.subr.mxu0 0.0
    %598 = vmatpush1.msra.mxu0 0.0
    %599 = vmatprep.subr.mxu0 0.0
    %600 = vmatpush1.msra.mxu0 0.0
    %601 = vmatprep.subr.mxu0 0.0
    %602 = vmatpush1.msra.mxu0 0.0
    %603 = vmatprep.mubr.f32.mxu0 0.0
    %604 = vmatmul.mubr.f32.gmra.mrb[0].mxu0 %v517
    %v605 = vpop.f32.mrb[0].mxu0
    %v606 = vadd.f32 %v538, %v605
    %v607 = vpop.f32.mrb[0].mxu0
    %608 = vdwg.mxu0
    %v609 = vld [vmem:[#allocation4 + $0x300] sm:$0xff]
    %v610 = vld [vmem:[#allocation4 + $0x308] sm:$0xff]
    %v611 = vld [vmem:[#allocation4 + $0x310] sm:$0xff]
    %v612 = vld [vmem:[#allocation4 + $0x318] sm:$0xff]
    %v613 = vld [vmem:[#allocation4 + $0x320] sm:$0xff]
    %v614 = vld [vmem:[#allocation4 + $0x328] sm:$0xff]
    %v615 = vld [vmem:[#allocation4 + $0x330] sm:$0xff]
    %v616 = vld [vmem:[#allocation4 + $0x338] sm:$0xff]
    %v617 = vld [vmem:[#allocation4 + $0x340] sm:$0xff]
    %v618 = vld [vmem:[#allocation4 + $0x348] sm:$0xff]
    %v619 = vld [vmem:[#allocation4 + $0x350] sm:$0xff]
    %v620 = vld [vmem:[#allocation4 + $0x358] sm:$0xff]
    %v621 = vld [vmem:[#allocation4 + $0x360] sm:$0xff]
    %v622 = vld [vmem:[#allocation4 + $0x368] sm:$0xff]
    %v623 = vld [vmem:[#allocation4 + $0x370] sm:$0xff]
    %v624 = vld [vmem:[#allocation4 + $0x378] sm:$0xff]
    %v625 = vld [vmem:[#allocation6 + $0x6] sm:$0x1]
    %v626 = vlaneseq
    %v627 = vshrl.u32 %v626, 7
    %v628 = vsub.s32 0, %v627
    %v629 = vrot.slane %v625, %v628
    %630 = vmatprep.subr.mxu0 0.0
    %631 = vmatpush1.msra.mxu0 %v609
    %632 = vmatprep.subr.mxu0 0.0
    %633 = vmatpush1.msra.mxu0 %v610
    %634 = vmatprep.subr.mxu0 0.0
    %635 = vmatpush1.msra.mxu0 %v611
    %636 = vmatprep.subr.mxu0 0.0
    %637 = vmatpush1.msra.mxu0 %v612
    %638 = vmatprep.subr.mxu0 0.0
    %639 = vmatpush1.msra.mxu0 %v613
    %640 = vmatprep.subr.mxu0 0.0
    %641 = vmatpush1.msra.mxu0 %v614
    %642 = vmatprep.subr.mxu0 0.0
    %643 = vmatpush1.msra.mxu0 %v615
    %644 = vmatprep.subr.mxu0 0.0
    %645 = vmatpush1.msra.mxu0 %v616
    %646 = vmatprep.subr.mxu0 0.0
    %647 = vmatpush1.msra.mxu0 %v617
    %648 = vmatprep.subr.mxu0 0.0
    %649 = vmatpush1.msra.mxu0 %v618
    %650 = vmatprep.subr.mxu0 0.0
    %651 = vmatpush1.msra.mxu0 %v619
    %652 = vmatprep.subr.mxu0 0.0
    %653 = vmatpush1.msra.mxu0 %v620
    %654 = vmatprep.subr.mxu0 0.0
    %655 = vmatpush1.msra.mxu0 %v621
    %656 = vmatprep.subr.mxu0 0.0
    %657 = vmatpush1.msra.mxu0 %v622
    %658 = vmatprep.subr.mxu0 0.0
    %659 = vmatpush1.msra.mxu0 %v623
    %660 = vmatprep.subr.mxu0 0.0
    %661 = vmatpush1.msra.mxu0 %v624
    %662 = vmatprep.subr.mxu0 0.0
    %663 = vmatpush1.msra.mxu0 0.0
    %664 = vmatprep.subr.mxu0 0.0
    %665 = vmatpush1.msra.mxu0 0.0
    %666 = vmatprep.subr.mxu0 0.0
    %667 = vmatpush1.msra.mxu0 0.0
    %668 = vmatprep.subr.mxu0 0.0
    %669 = vmatpush1.msra.mxu0 0.0
    %670 = vmatprep.subr.mxu0 0.0
    %671 = vmatpush1.msra.mxu0 0.0
    %672 = vmatprep.subr.mxu0 0.0
    %673 = vmatpush1.msra.mxu0 0.0
    %674 = vmatprep.subr.mxu0 0.0
    %675 = vmatpush1.msra.mxu0 0.0
    %676 = vmatprep.subr.mxu0 0.0
    %677 = vmatpush1.msra.mxu0 0.0
    %678 = vmatprep.subr.mxu0 0.0
    %679 = vmatpush1.msra.mxu0 0.0
    %680 = vmatprep.subr.mxu0 0.0
    %681 = vmatpush1.msra.mxu0 0.0
    %682 = vmatprep.subr.mxu0 0.0
    %683 = vmatpush1.msra.mxu0 0.0
    %684 = vmatprep.subr.mxu0 0.0
    %685 = vmatpush1.msra.mxu0 0.0
    %686 = vmatprep.subr.mxu0 0.0
    %687 = vmatpush1.msra.mxu0 0.0
    %688 = vmatprep.subr.mxu0 0.0
    %689 = vmatpush1.msra.mxu0 0.0
    %690 = vmatprep.subr.mxu0 0.0
    %691 = vmatpush1.msra.mxu0 0.0
    %692 = vmatprep.subr.mxu0 0.0
    %693 = vmatpush1.msra.mxu0 0.0
    %694 = vmatprep.mubr.f32.mxu0 0.0
    %695 = vmatmul.mubr.f32.gmra.mrb[0].mxu0 %v517
    %v696 = vpop.f32.mrb[0].mxu0
    %v697 = vadd.f32 %v629, %v696
    %v698 = vpop.f32.mrb[0].mxu0
    %699 = vdwg.mxu0
    %vm700 = vcmp.gt.f32.partialorder %v697, 0.0
    %v701 = vmul.f32 %v697, 0.01
    %v702 = vsel %vm700, %v697, %v701
    %v703 = vld [vmem:[#allocation4 + $0x380] sm:$0xff]
    %v704 = vld [vmem:[#allocation4 + $0x388] sm:$0xff]
    %v705 = vld [vmem:[#allocation4 + $0x390] sm:$0xff]
    %v706 = vld [vmem:[#allocation4 + $0x398] sm:$0xff]
    %v707 = vld [vmem:[#allocation4 + $0x3a0] sm:$0xff]
    %v708 = vld [vmem:[#allocation4 + $0x3a8] sm:$0xff]
    %v709 = vld [vmem:[#allocation4 + $0x3b0] sm:$0xff]
    %v710 = vld [vmem:[#allocation4 + $0x3b8] sm:$0xff]
    %v711 = vld [vmem:[#allocation4 + $0x3c0] sm:$0xff]
    %v712 = vld [vmem:[#allocation4 + $0x3c8] sm:$0xff]
    %v713 = vld [vmem:[#allocation4 + $0x3d0] sm:$0xff]
    %v714 = vld [vmem:[#allocation4 + $0x3d8] sm:$0xff]
    %v715 = vld [vmem:[#allocation4 + $0x3e0] sm:$0xff]
    %v716 = vld [vmem:[#allocation4 + $0x3e8] sm:$0xff]
    %v717 = vld [vmem:[#allocation4 + $0x3f0] sm:$0xff]
    %v718 = vld [vmem:[#allocation4 + $0x3f8] sm:$0xff]
    %v719 = vld [vmem:[#allocation6 + $0x7] sm:$0x1]
    %v720 = vlaneseq
    %v721 = vshrl.u32 %v720, 7
    %v722 = vsub.s32 0, %v721
    %v723 = vrot.slane %v719, %v722
    %724 = vmatprep.subr.mxu0 0.0
    %725 = vmatpush1.msra.mxu0 %v703
    %726 = vmatprep.subr.mxu0 0.0
    %727 = vmatpush1.msra.mxu0 %v704
    %728 = vmatprep.subr.mxu0 0.0
    %729 = vmatpush1.msra.mxu0 %v705
    %730 = vmatprep.subr.mxu0 0.0
    %731 = vmatpush1.msra.mxu0 %v706
    %732 = vmatprep.subr.mxu0 0.0
    %733 = vmatpush1.msra.mxu0 %v707
    %734 = vmatprep.subr.mxu0 0.0
    %735 = vmatpush1.msra.mxu0 %v708
    %736 = vmatprep.subr.mxu0 0.0
    %737 = vmatpush1.msra.mxu0 %v709
    %738 = vmatprep.subr.mxu0 0.0
    %739 = vmatpush1.msra.mxu0 %v710
    %740 = vmatprep.subr.mxu0 0.0
    %741 = vmatpush1.msra.mxu0 %v711
    %742 = vmatprep.subr.mxu0 0.0
    %743 = vmatpush1.msra.mxu0 %v712
    %744 = vmatprep.subr.mxu0 0.0
    %745 = vmatpush1.msra.mxu0 %v713
    %746 = vmatprep.subr.mxu0 0.0
    %747 = vmatpush1.msra.mxu0 %v714
    %748 = vmatprep.subr.mxu0 0.0
    %749 = vmatpush1.msra.mxu0 %v715
    %750 = vmatprep.subr.mxu0 0.0
    %751 = vmatpush1.msra.mxu0 %v716
    %752 = vmatprep.subr.mxu0 0.0
    %753 = vmatpush1.msra.mxu0 %v717
    %754 = vmatprep.subr.mxu0 0.0
    %755 = vmatpush1.msra.mxu0 %v718
    %756 = vmatprep.subr.mxu0 0.0
    %757 = vmatpush1.msra.mxu0 0.0
    %758 = vmatprep.subr.mxu0 0.0
    %759 = vmatpush1.msra.mxu0 0.0
    %760 = vmatprep.subr.mxu0 0.0
    %761 = vmatpush1.msra.mxu0 0.0
    %762 = vmatprep.subr.mxu0 0.0
    %763 = vmatpush1.msra.mxu0 0.0
    %764 = vmatprep.subr.mxu0 0.0
    %765 = vmatpush1.msra.mxu0 0.0
    %766 = vmatprep.subr.mxu0 0.0
    %767 = vmatpush1.msra.mxu0 0.0
    %768 = vmatprep.subr.mxu0 0.0
    %769 = vmatpush1.msra.mxu0 0.0
    %770 = vmatprep.subr.mxu0 0.0
    %771 = vmatpush1.msra.mxu0 0.0
    %772 = vmatprep.subr.mxu0 0.0
    %773 = vmatpush1.msra.mxu0 0.0
    %774 = vmatprep.subr.mxu0 0.0
    %775 = vmatpush1.msra.mxu0 0.0
    %776 = vmatprep.subr.mxu0 0.0
    %777 = vmatpush1.msra.mxu0 0.0
    %778 = vmatprep.subr.mxu0 0.0
    %779 = vmatpush1.msra.mxu0 0.0
    %780 = vmatprep.subr.mxu0 0.0
    %781 = vmatpush1.msra.mxu0 0.0
    %782 = vmatprep.subr.mxu0 0.0
    %783 = vmatpush1.msra.mxu0 0.0
    %784 = vmatprep.subr.mxu0 0.0
    %785 = vmatpush1.msra.mxu0 0.0
    %786 = vmatprep.subr.mxu0 0.0
    %787 = vmatpush1.msra.mxu0 0.0
    %788 = vmatprep.mubr.f32.mxu0 0.0
    %789 = vmatmul.mubr.f32.gmra.mrb[0].mxu0 %v702
    %v790 = vpop.f32.mrb[0].mxu0
    %v791 = vadd.f32 %v723, %v790
    %v792 = vpop.f32.mrb[0].mxu0
    %793 = vdwg.mxu0
    %v794 = vlaneseq
    %v795 = vand.u32 %v794, 127
    %vm796 = vcmp.eq.s32.totalorder %v795, 16
    %v797 = vmax.f32 %v697, 0.0
    %v798 = vsel %vm796, %v797, 0.0
    %v799 = vadd.f32 %v606, %v791
    %800 = vst [vmem:[%s3] sm:$0xff] %v799
    %v801 = vadd.f32 %v423, %v798
    %802 = vst [vmem:[%s3 + $0x8] sm:$0xff] %v801
    // Predicated region
    $region26: #{attention_ae_end.1} parent=1 // pred_check
      _
    $region27: #{attention_ae_end.1} parent=1 // pred_check_branch
      %804 = sbr.rel (0) target = $region29
    $region28: #{attention_ae_end.1} parent=1 // pred_region
      _
    $region29: #{attention_ae_end.1} parent=1 // pred_fallthru
      _
    // Predicated region
    $region30: #{attention_ae_end.1} parent=1 // pred_check
      _
    $region31: #{attention_ae_end.1} parent=1 // pred_check_branch
      %806 = sbr.rel (0) target = $region33
    $region32: #{attention_ae_end.1} parent=1 // pred_region
      _
    $region33: #{attention_ae_end.1} parent=1 // pred_fallthru
      _
    %807 = vsyncpa [#allocation3], 1
    %808 = vsyncpa [#allocation5], 1

</llo_original>
